<compile_context>
chip_gen: v5e
topology: v5e:2x2
jax: 0.10.0
libtpu: 0.0.40
codegen_flags: <defaults>
</compile_context>

<pallas_src>
import jax
import jax.numpy as jnp
from jax.experimental import pallas as pl
from jax.experimental.pallas import tpu as pltpu


# Default max tile sizes (sized so the double-buffered working set fits the
# smallest scoped-VMEM default across v5e/v6e/v7x with plenty of headroom).
_MAX_TILE_B = 256    # sublane tile; multiple of 8
_MAX_TILE_D = 2048   # lane tile;    multiple of 128


def _masked_identity_kernel(cond_ref, mask_ref, out_ref):
    # cond_ref: (TB, TD) tile, mask_ref: (TB, 1) tile.  Pure VPU multiply with
    # lane-broadcast of the per-row mask column.
    out_ref[...] = cond_ref[...] * mask_ref[...].astype(cond_ref.dtype)


def base_nn_condition_forward(
    condition: jax.Array,
    mask: jax.Array | None = None,
    *,
    min_pallas_bytes: int = 1 << 20,   # skip Pallas below ~1 MiB
    tile_b: int | None = None,
    tile_d: int | None = None,
):
    """JAX/Pallas equivalent of BaseNNCondition.forward (masked identity).

    condition: (b, *cond_out_shape)
    mask:      (b,) or None  (None == no masking)
    returns:   (b, *cond_out_shape), same dtype as `condition`
    """
    # --- mask=None: pure pass-through, never touch HBM again. ---
    if mask is None:
        return condition

    orig_shape = condition.shape
    b = orig_shape[0]
    d = 1
    for s in orig_shape[1:]:
        d *= s

    mask_row = jnp.asarray(mask).reshape(b).astype(condition.dtype)

    itemsize = jnp.dtype(condition.dtype).itemsize
    nbytes = b * max(d, 1) * itemsize

    # --- tiny tensors: plain XLA fuses the broadcast-multiply for free. ---
    if d == 0 or nbytes < min_pallas_bytes:
        bshape = (b,) + (1,) * (len(orig_shape) - 1)
        return condition * mask_row.reshape(bshape)

    # --- Pallas path: lane-dense tiled elementwise multiply. ---
    cond2d = condition.reshape(b, d)
    mask2d = mask_row.reshape(b, 1)

    if tile_b is None:
        tile_b = b if b <= _MAX_TILE_B else _MAX_TILE_B     # full extent or x8
    if tile_d is None:
        tile_d = d if d <= _MAX_TILE_D else _MAX_TILE_D     # full extent or x128

    grid = (pl.cdiv(b, tile_b), pl.cdiv(d, tile_d))

    out2d = pl.pallas_call(
        _masked_identity_kernel,
        out_shape=jax.ShapeDtypeStruct((b, d), condition.dtype),
        grid=grid,
        in_specs=[
            pl.BlockSpec((tile_b, tile_d), lambda i, j: (i, j)),
            # mask column: independent of the D grid axis -> reused across j.
            pl.BlockSpec((tile_b, 1), lambda i, j: (i, 0)),
        ],
        out_specs=pl.BlockSpec((tile_b, tile_d), lambda i, j: (i, j)),
        compiler_params=pltpu.CompilerParams(
            # Both axes independent -> megacore sharding on v7x, harmless on
            # single-TC v5e/v6e.
            dimension_semantics=("parallel", "parallel"),
        ),
    )(cond2d, mask2d)

    return out2d.reshape(orig_shape)


if __name__ == "__main__":
    key = jax.random.PRNGKey(0)
    k1, k2, k3, k4 = jax.random.split(key, 4)

    # --- Case 1: tiny shapes (b=2, cond_out_shape=(32,)) — wrapper fast paths.
    b0, d0 = 2, 32
    cond0 = jax.random.normal(k1, (b0, d0), dtype=jnp.float32)
    mask0 = (jax.random.uniform(k2, (b0,)) > 0.5).astype(jnp.float32)

    out_fast = jax.block_until_ready(base_nn_condition_forward(cond0, mask0))
    out_none = jax.block_until_ready(base_nn_condition_forward(cond0, None))

    ref0 = cond0 * mask0[:, None]
    assert out_fast.shape == cond0.shape
    assert jnp.allclose(out_fast, ref0, atol=1e-6)
    assert out_none is cond0 or jnp.allclose(out_none, cond0, atol=1e-6)

    # --- Case 2: force the Pallas kernel on the tiny shape (full-extent block).
    out_pallas_small = jax.block_until_ready(
        base_nn_condition_forward(cond0, mask0, min_pallas_bytes=0)
    )
    assert jnp.allclose(out_pallas_small, ref0, atol=1e-6)

    # --- Case 3: exercise the tiled grid path on a small 3-D condition:
    #     batch=16, cond_out_shape=(8, 32) -> d=256, tiles (8, 128) -> grid (2, 2).
    b1, c1, h1 = 16, 8, 32
    cond1 = jax.random.normal(k3, (b1, c1, h1), dtype=jnp.float32)
    mask1 = (jax.random.uniform(k4, (b1,)) > 0.5).astype(jnp.float32)

    out_tiled = jax.block_until_ready(
        base_nn_condition_forward(
            cond1, mask1, min_pallas_bytes=0, tile_b=8, tile_d=128
        )
    )
    ref1 = cond1 * mask1[:, None, None]
    assert out_tiled.shape == cond1.shape
    assert jnp.allclose(out_tiled, ref1, atol=1e-6)

    print("KERNEL_OK")
</pallas_src>

<mosaic_0001>
module attributes {stable_mosaic.version = 11 : i64} {
  func.func @_masked_identity_kernel(%arg0: i32, %arg1: i32, %arg2: memref<2x32xf32, #tpu.memory_space<vmem>>, %arg3: memref<2x1xf32, #tpu.memory_space<vmem>>, %arg4: memref<2x32xf32, #tpu.memory_space<vmem>>) attributes {dimension_semantics = [#tpu.dimension_semantics<parallel>, #tpu.dimension_semantics<parallel>], iteration_bounds = array<i64: 1, 1>, scalar_prefetch = 0 : i64, scratch_operands = 0 : i64, tpu.core_type = #tpu.core_type<tc>, window_params = [{transform_indices = @transform_0, window_bounds = array<i64: 2, 32>}, {transform_indices = @transform_1, window_bounds = array<i64: 2, 1>}, {transform_indices = @transform_2, window_bounds = array<i64: 2, 32>}]} {
    %c0 = arith.constant 0 : index
    %c0_0 = arith.constant 0 : index
    %0 = vector.load %arg2[%c0, %c0_0] : memref<2x32xf32, #tpu.memory_space<vmem>>, vector<2x32xf32>
    %c0_1 = arith.constant 0 : index
    %c0_2 = arith.constant 0 : index
    %1 = vector.load %arg3[%c0_1, %c0_2] : memref<2x1xf32, #tpu.memory_space<vmem>>, vector<2x1xf32>
    %2 = vector.broadcast %1 : vector<2x1xf32> to vector<2x32xf32>
    %3 = arith.mulf %0, %2 : vector<2x32xf32>
    %c0_3 = arith.constant 0 : index
    %c0_4 = arith.constant 0 : index
    %4 = vector.load %arg4[%c0_3, %c0_4] : memref<2x32xf32, #tpu.memory_space<vmem>>, vector<2x32xf32>
    tpu.vector_store %arg4[%c0_3, %c0_4], %3 {strides = array<i32>} : memref<2x32xf32, #tpu.memory_space<vmem>>, vector<2x32xf32>,
    return
  }
  func.func @transform_0(%arg0: i32, %arg1: i32) -> (i32, i32) {
    %c0_i32 = arith.constant 0 : i32
    return %arg0, %arg1 : i32, i32
  }
  func.func @transform_1(%arg0: i32, %arg1: i32) -> (i32, i32) {
    %c0_i32 = arith.constant 0 : i32
    %c0_i32_0 = arith.constant 0 : i32
    return %arg0, %c0_i32 : i32, i32
  }
  func.func @transform_2(%arg0: i32, %arg1: i32) -> (i32, i32) {
    %c0_i32 = arith.constant 0 : i32
    return %arg0, %arg1 : i32, i32
  }
}

</mosaic_0001>

<llo_original>
// kernel: tpu_custom_call.1
$region0: #{tpu_custom_call.1}
  #allocation0 [shape = 'u32[]', space=smem, size = 0x4, offset = 0x4, fixed_abs, tag = 'smem constant byte address 0x4 - core index']
  #allocation1 [shape = 'u32[72,128]{1,0:T(1,128)}', space=vmem, size = 0x9000, scoped, tag = 'internal scratch']
  %s0 = inlined_call_operand.vmem [shape: f32[2,32], index: 0, kind: input, shape index: {}]
  %s1 = inlined_call_operand.vmem [shape: f32[2,1], index: 1, kind: input, shape index: {}]
  %s2 = inlined_call_operand.hbm [shape: f32[2,32], index: 2, kind: output, shape index: {}]
  %s3 = sld [smem:[#allocation0]]
  $region18: #{tpu_custom_call.1} parent=0
    _
  %s5 = ssub.s32 1, %s3
  %s6 = scalar_select 0, %s5, %s3
  $region1: #{tpu_custom_call.1} parent=0
    #allocation2 [shape = 'u8[1024]{0}', space=vmem, size = 0x400, scoped, tag = 'output window, operand 0, single buffered']
    #allocation3 [shape = 's32[1]{0}', space=sflag, size = 0x4, scoped, tag = 'scoped memory for tpu_custom_call.1']
    %7 = vsyncpa [#allocation3], 0
    // Predicated region
    $region2: #{tpu_custom_call.1} parent=1 // pred_check
      _
    $region3: #{tpu_custom_call.1} parent=1 // pred_check_branch
      %9 = sbr.rel (0) target = $region5
    $region4: #{tpu_custom_call.1} parent=1 // pred_region
      _
    $region5: #{tpu_custom_call.1} parent=1 // pred_fallthru
      _
    // Predicated region
    $region6: #{tpu_custom_call.1} parent=1 // pred_check
      _
    $region7: #{tpu_custom_call.1} parent=1 // pred_check_branch
      %11 = sbr.rel (0) target = $region9
    $region8: #{tpu_custom_call.1} parent=1 // pred_region
      _
    $region9: #{tpu_custom_call.1} parent=1 // pred_fallthru
      _
    %v12 = vld [vmem:[%s0] sm:$0x3]
    %v13 = vld [vmem:[%s1] sm:$0x3]
    %15 = vset.pattern.permute.xlu0 0
    %16 = vperm.xlu0 %15, %v13
    %v17 = vpop.permute.xlu0 %16
    %v19 = vmul.f32 %v12, %v17
    %vm20 = vcmask 254976
    %21 = vst.msk [vmem:[#allocation2] sm:$0x3] %vm20, %v19
    // Predicated region
    $region10: #{tpu_custom_call.1} parent=1 // pred_check
      _
    $region11: #{tpu_custom_call.1} parent=1 // pred_check_branch
      %23 = sbr.rel (0) target = $region13
    $region12: #{tpu_custom_call.1} parent=1 // pred_region
      %25 = vsyncadd [#allocation3], 0
      %s27 = sshll.u32 [#allocation2], 4
      %s28 = int_to_ptr.vmem [resolvable:$true] %s27
      %s29 = sshll.u32 %s2, 4
      %s30 = int_to_ptr.hbm [resolvable:$true] %s29
      %32 = dma.vmem_to_hbm [thread:$0]  %s28, 32, %s30, [#allocation3]
    $region13: #{tpu_custom_call.1} parent=1 // pred_fallthru
      _
    // Predicated region
    $region14: #{tpu_custom_call.1} parent=1 // pred_check
      _
    $region15: #{tpu_custom_call.1} parent=1 // pred_check_branch
      %34 = sbr.rel (0) target = $region17
    $region16: #{tpu_custom_call.1} parent=1 // pred_region
      %36 = dma.done [#allocation3], 32
    $region17: #{tpu_custom_call.1} parent=1 // pred_fallthru
      _
    %37 = vsyncpa [#allocation3], 1

</llo_original>
